<compile_context>
chip_gen: v6e
topology: v6e:2x2x1
jax: 0.10.0
libtpu: 0.0.40
codegen_flags: <defaults>
</compile_context>

<pallas_src>
import functools

import jax
import jax.numpy as jnp
from jax import lax
from jax.experimental import pallas as pl
from jax.experimental.pallas import tpu as pltpu

ALPHA = 0.01
VAR_MIN = 1e-8

MIN_KERNEL_ELEMS = 1 << 20          # below ~1M elems the XLA fused reduce wins
TILE_BYTES = 4 << 20                # ~4 MiB per input block (x2 double buffer)
MAX_CHUNK_ROWS = 512                # inner accumulation chunk (vreg pressure)
MIN_BLOCKS_PER_SPLIT = 4            # only split across cores if each split has >= this
VMEM_LIMIT_BYTES = 32 * 1024 * 1024 # safe on v5e/v6e/v7x


def _cdiv(a, b):
    return (a + b - 1) // b


def _reward_objective_ref(reward, mean, variance):
    """Plain-JAX reference / small-input fallback (two-pass, like PyTorch)."""
    r = reward.astype(jnp.float32)
    new_mean = ALPHA * r.mean() + (1.0 - ALPHA) * mean
    new_var = ALPHA * ((r - new_mean) ** 2).mean() + (1.0 - ALPHA) * variance
    new_var = jnp.maximum(new_var, VAR_MIN)
    return reward, new_mean, new_var


def _pick_chunk_rows(tile_rows, sub_mult, target=MAX_CHUNK_ROWS):
    """Largest multiple of sub_mult that divides tile_rows and is <= target."""
    if tile_rows <= target:
        return tile_rows
    best = sub_mult
    c = sub_mult
    while c <= target:
        if tile_rows % c == 0:
            best = c
        c += sub_mult
    return best


def _reward_stats_kernel(reward_ref, shift_ref, sum_ref, sq_ref,
                         sum_acc, sq_acc, *,
                         tile_rows, chunk_rows, num_rows,
                         blocks_per_split, needs_mask):
    """Per-split single-pass shifted-moment accumulation.

    reward_ref : VMEM [tile_rows, 128] (input dtype; cast to f32 at load)
    shift_ref  : SMEM [1, 1] f32 (previous running mean, numerical shift)
    sum_ref    : SMEM [1, 1] f32 out -> sum(r - shift)   for this split
    sq_ref     : SMEM [1, 1] f32 out -> sum((r-shift)^2) for this split
    sum_acc, sq_acc : VMEM (8, 128) f32 per-lane partial accumulators
    """
    c = pl.program_id(0)       # split (core) index
    i = pl.program_id(1)       # block index within the split (reduction axis)

    @pl.when(i == 0)
    def _():
        sum_acc[...] = jnp.zeros_like(sum_acc)
        sq_acc[...] = jnp.zeros_like(sq_acc)

    shift = shift_ref[0, 0]
    n_chunks = tile_rows // chunk_rows

    if needs_mask:
        # Valid rows remaining in this (possibly partial / fully-padded) block,
        # based on the *unclamped* global block index.
        rows_valid = num_rows - (c * blocks_per_split + i) * tile_rows
        base_iota = lax.broadcasted_iota(jnp.int32, (chunk_rows, 128), 0)

    def chunk_body(ci, carry):
        s, sq = carry
        start = pl.multiple_of(ci * chunk_rows, chunk_rows)
        blk = reward_ref[pl.ds(start, chunk_rows), :].astype(jnp.float32) - shift
        if needs_mask:
            blk = jnp.where(base_iota < (rows_valid - ci * chunk_rows), blk, 0.0)
        # Reduce only over the leading (grouped-sublane) axis: pure VALU work,
        # fully hidden under the DMA of the next block.
        b3 = blk.reshape(chunk_rows // 8, 8, 128)
        return (s + jnp.sum(b3, axis=0), sq + jnp.sum(b3 * b3, axis=0))

    z = jnp.zeros((8, 128), jnp.float32)
    s, sq = lax.fori_loop(0, n_chunks, chunk_body, (z, z), unroll=True)
    sum_acc[...] += s
    sq_acc[...] += sq

    @pl.when(i == pl.num_programs(1) - 1)
    def _():
        # Single cross-lane/sublane (XLU) reduce per split, at the end only.
        sum_ref[0, 0] = jnp.sum(sum_acc[...])
        sq_ref[0, 0] = jnp.sum(sq_acc[...])


def reward_objective_forward(reward, mean, variance, *, force_kernel=False,
                             _tile_rows=None, _nsplit=None):
    """RewardObjective forward.

    reward   : f32 / bf16 array of any shape (returned unchanged).
    mean     : scalar f32 running-mean buffer.
    variance : scalar f32 running-variance buffer.

    Returns (reward, new_mean, new_variance); the caller carries the updated
    buffers (equivalent of the in-place .copy_ on the PyTorch buffers).
    `_tile_rows` / `_nsplit` are testing overrides.
    """
    mean = jnp.asarray(mean, jnp.float32)
    variance = jnp.asarray(variance, jnp.float32)

    total = int(reward.size)
    itemsize = jnp.dtype(reward.dtype).itemsize
    # Sub-32-bit dtypes pack along sublanes -> require a larger row multiple.
    sub_mult = {4: 8, 2: 16, 1: 32}.get(itemsize, 8)

    num_rows = total // 128
    shape_ok = (total % 128 == 0) and (num_rows >= sub_mult)
    if not shape_ok or (not force_kernel and total < MIN_KERNEL_ELEMS):
        # Tiny / oddly-shaped rewards: fused XLA reduction beats a kernel launch.
        return _reward_objective_ref(reward, mean, variance)

    # ---- tiling: size blocks by bytes (~TILE_BYTES per block) ----
    if _tile_rows is not None:
        tile_rows = int(_tile_rows)
    else:
        target = max(sub_mult,
                     (TILE_BYTES // (128 * itemsize)) // sub_mult * sub_mult)
        tile_rows = min(target, (num_rows // sub_mult) * sub_mult)
    assert tile_rows >= sub_mult and tile_rows % sub_mult == 0
    chunk_rows = _pick_chunk_rows(tile_rows, sub_mult)

    num_blocks = _cdiv(num_rows, tile_rows)
    if _nsplit is not None:
        nsplit = int(_nsplit)
    else:
        # Leading "parallel" axis: sharded across TensorCores on v7x, runs
        # sequentially (cheaply) on 1-TC chips.
        nsplit = 2 if num_blocks >= 2 * MIN_BLOCKS_PER_SPLIT else 1
    blocks_per_split = _cdiv(num_blocks, nsplit)
    # Masking needed iff the padded grid covers more rows than exist.
    needs_mask = (nsplit * blocks_per_split * tile_rows) != num_rows

    flat = reward.reshape(num_rows, 128)     # lane-dense view, no dtype cast
    shift_in = mean.reshape(1, 1)            # numerical shift for sum-of-squares

    kernel = functools.partial(
        _reward_stats_kernel,
        tile_rows=tile_rows,
        chunk_rows=chunk_rows,
        num_rows=num_rows,
        blocks_per_split=blocks_per_split,
        needs_mask=needs_mask,
    )

    last_block = num_blocks - 1

    def data_index_map(c, i):
        # Padded blocks (beyond the data) are clamped to the last valid block;
        # their rows are fully masked in the kernel, so re-reading is harmless.
        return (jnp.minimum(c * blocks_per_split + i, last_block), 0)

    psum, psq = pl.pallas_call(
        kernel,
        out_shape=(
            jax.ShapeDtypeStruct((nsplit, 1), jnp.float32),
            jax.ShapeDtypeStruct((nsplit, 1), jnp.float32),
        ),
        grid_spec=pltpu.PrefetchScalarGridSpec(
            num_scalar_prefetch=0,
            grid=(nsplit, blocks_per_split),
            in_specs=[
                pl.BlockSpec((tile_rows, 128), data_index_map),
                pl.BlockSpec(memory_space=pltpu.SMEM),
            ],
            out_specs=(
                pl.BlockSpec((1, 1), lambda c, i: (c, 0),
                             memory_space=pltpu.SMEM),
                pl.BlockSpec((1, 1), lambda c, i: (c, 0),
                             memory_space=pltpu.SMEM),
            ),
            scratch_shapes=[
                pltpu.VMEM((8, 128), jnp.float32),   # per-lane sum partials
                pltpu.VMEM((8, 128), jnp.float32),   # per-lane sumsq partials
            ],
        ),
        compiler_params=pltpu.CompilerParams(
            dimension_semantics=("parallel", "arbitrary"),
            vmem_limit_bytes=VMEM_LIMIT_BYTES,
        ),
        cost_estimate=pl.CostEstimate(
            flops=3 * total,
            transcendentals=0,
            bytes_accessed=total * itemsize + 8 * nsplit + 4,
        ),
    )(flat, shift_in)

    # ---- finalize (scalar math, fused by XLA; trivially combines splits) ----
    inv_n = 1.0 / float(total)
    s1 = jnp.sum(psum) * inv_n               # E[r - shift]
    s2 = jnp.sum(psq) * inv_n                # E[(r - shift)^2]
    e_r = mean + s1                          # E[r]
    new_mean = ALPHA * e_r + (1.0 - ALPHA) * mean
    d = new_mean - mean                      # new_mean - shift
    # ((r - new_mean)^2).mean() == E[(r-shift)^2] - 2*d*E[r-shift] + d^2
    sq_dev_mean = jnp.maximum(s2 - 2.0 * d * s1 + d * d, 0.0)
    new_var = ALPHA * sq_dev_mean + (1.0 - ALPHA) * variance
    new_var = jnp.maximum(new_var, VAR_MIN)  # .clamp(min=1e-8)

    # Passthrough: reward is unchanged by definition, so just return it.
    return reward, new_mean, new_var


def _check(reward, mean0, var0, out, new_mean, new_var, tag):
    ref_mean = ALPHA * reward.astype(jnp.float32).mean() + (1.0 - ALPHA) * mean0
    ref_var = ALPHA * ((reward.astype(jnp.float32) - ref_mean) ** 2).mean() \
        + (1.0 - ALPHA) * var0
    ref_var = jnp.maximum(ref_var, VAR_MIN)
    assert jnp.allclose(out, reward), f"{tag}: reward passthrough mismatch"
    assert jnp.allclose(new_mean, ref_mean, rtol=1e-5, atol=1e-6), \
        f"{tag}: mean mismatch ({new_mean} vs {ref_mean})"
    assert jnp.allclose(new_var, ref_var, rtol=1e-5, atol=1e-6), \
        f"{tag}: variance mismatch ({new_var} vs {ref_var})"


if __name__ == "__main__":
    key = jax.random.PRNGKey(0)
    k1, k2 = jax.random.split(key)

    # Buffers as in __init__: mean=0.0, variance=1.0
    mean0 = jnp.float32(0.0)
    var0 = jnp.float32(1.0)

    # --- Test 1: NCHW reward, small: B=2, C=4, H=16, W=16 (2048 = 16*128) ---
    reward = jax.random.normal(k1, (2, 4, 16, 16), dtype=jnp.float32)
    out, new_mean, new_var = reward_objective_forward(
        reward, mean0, var0, force_kernel=True)
    jax.block_until_ready((out, new_mean, new_var))
    _check(reward, mean0, var0, out, new_mean, new_var, "kernel/simple")

    # --- Test 2: exercise the masked tail + 2-way split paths at small scale
    # (100 rows, tile forced to 16 rows -> 7 data blocks + 1 padded block). ---
    reward2 = 3.0 + 0.5 * jax.random.normal(k2, (2, 4, 25, 64), dtype=jnp.float32)
    out2, m2, v2 = reward_objective_forward(
        reward2, mean0, var0, force_kernel=True, _tile_rows=16, _nsplit=2)
    jax.block_until_ready((out2, m2, v2))
    _check(reward2, mean0, var0, out2, m2, v2, "kernel/masked+split")

    # --- Test 3: auto path on a tiny input takes the jnp fallback. ---
    out3, m3, v3 = reward_objective_forward(reward, mean0, var0)
    jax.block_until_ready((out3, m3, v3))
    _check(reward, mean0, var0, out3, m3, v3, "fallback")

    print("KERNEL_OK")
</pallas_src>

<mosaic_0001>
module attributes {stable_mosaic.version = 11 : i64} {
  func.func @_reward_stats_kernel(%arg0: i32, %arg1: i32, %arg2: memref<16x128xf32, #tpu.memory_space<vmem>>, %arg3: memref<1x1xf32, #tpu.memory_space<smem>>, %arg4: memref<1x1xf32, #tpu.memory_space<smem>>, %arg5: memref<1x1xf32, #tpu.memory_space<smem>>, %arg6: memref<8x128xf32, #tpu.memory_space<vmem>>, %arg7: memref<8x128xf32, #tpu.memory_space<vmem>>) attributes {dimension_semantics = [#tpu.dimension_semantics<parallel>, #tpu.dimension_semantics<arbitrary>], iteration_bounds = array<i64: 1, 1>, scalar_prefetch = 0 : i64, scratch_operands = 2 : i64, tpu.core_type = #tpu.core_type<tc>, window_params = [{transform_indices = @transform_0, window_bounds = array<i64: 16, 128>}, {transform_indices = @transform_1, window_bounds = array<i64: 1, 1>}, {transform_indices = @transform_2, window_bounds = array<i64: 1, 1>}, {transform_indices = @transform_3, window_bounds = array<i64: 1, 1>}]} {
    %c0_i32 = arith.constant 0 : i32
    %0 = arith.cmpi eq, %arg1, %c0_i32 : i32
    %1 = arith.extui %0 : i1 to i32
    %c0_i32_0 = arith.constant 0 : i32
    %2 = arith.cmpi ne, %1, %c0_i32_0 : i32
    scf.if %2 {
      %cst_16 = arith.constant 0.000000e+00 : f32
      %26 = vector.broadcast %cst_16 : f32 to vector<8x128xf32>
      %c0_17 = arith.constant 0 : index
      %c0_18 = arith.constant 0 : index
      %27 = vector.load %arg6[%c0_17, %c0_18] : memref<8x128xf32, #tpu.memory_space<vmem>>, vector<8x128xf32>
      tpu.vector_store %arg6[%c0_17, %c0_18], %26 {strides = array<i32>} : memref<8x128xf32, #tpu.memory_space<vmem>>, vector<8x128xf32>,
      %cst_19 = arith.constant 0.000000e+00 : f32
      %28 = vector.broadcast %cst_19 : f32 to vector<8x128xf32>
      %c0_20 = arith.constant 0 : index
      %c0_21 = arith.constant 0 : index
      %29 = vector.load %arg7[%c0_20, %c0_21] : memref<8x128xf32, #tpu.memory_space<vmem>>, vector<8x128xf32>
      tpu.vector_store %arg7[%c0_20, %c0_21], %28 {strides = array<i32>} : memref<8x128xf32, #tpu.memory_space<vmem>>, vector<8x128xf32>,
    } else {
    }
    %c0 = arith.constant 0 : index
    %c0_1 = arith.constant 0 : index
    %3 = memref.load %arg3[%c0, %c0_1] : memref<1x1xf32, #tpu.memory_space<smem>>
    %cst = arith.constant 0.000000e+00 : f32
    %4 = vector.broadcast %cst : f32 to vector<8x128xf32>
    %c0_i32_2 = arith.constant 0 : i32
    %c16_i32 = arith.constant 16 : i32
    %5 = arith.muli %c0_i32_2, %c16_i32 : i32
    %6 = tpu.assume_multiple %5, 16 : i32
    %7 = arith.index_cast %6 : i32 to index
    %c0_3 = arith.constant 0 : index
    %8 = vector.load %arg2[%7, %c0_3] : memref<16x128xf32, #tpu.memory_space<vmem>>, vector<16x128xf32>
    %9 = vector.broadcast %3 : f32 to vector<16x128xf32>
    %10 = arith.subf %8, %9 : vector<16x128xf32>
    %11 = vector.shape_cast %10 : vector<16x128xf32> to vector<2x8x128xf32>
    %cst_4 = arith.constant dense<0.000000e+00> : vector<8x128xf32>
    %12 = vector.multi_reduction <add>, %11, %cst_4 [0] : vector<2x8x128xf32> to vector<8x128xf32>
    %13 = arith.addf %4, %12 : vector<8x128xf32>
    %14 = arith.mulf %11, %11 : vector<2x8x128xf32>
    %cst_5 = arith.constant dense<0.000000e+00> : vector<8x128xf32>
    %15 = vector.multi_reduction <add>, %14, %cst_5 [0] : vector<2x8x128xf32> to vector<8x128xf32>
    %16 = arith.addf %4, %15 : vector<8x128xf32>
    %c1_i32 = arith.constant 1 : i32
    %c0_6 = arith.constant 0 : index
    %c0_7 = arith.constant 0 : index
    %17 = vector.load %arg6[%c0_6, %c0_7] : memref<8x128xf32, #tpu.memory_space<vmem>>, vector<8x128xf32>
    %18 = arith.addf %17, %13 : vector<8x128xf32>
    %c0_8 = arith.constant 0 : index
    %c0_9 = arith.constant 0 : index
    %19 = vector.load %arg6[%c0_8, %c0_9] : memref<8x128xf32, #tpu.memory_space<vmem>>, vector<8x128xf32>
    tpu.vector_store %arg6[%c0_8, %c0_9], %18 {strides = array<i32>} : memref<8x128xf32, #tpu.memory_space<vmem>>, vector<8x128xf32>,
    %c0_10 = arith.constant 0 : index
    %c0_11 = arith.constant 0 : index
    %20 = vector.load %arg7[%c0_10, %c0_11] : memref<8x128xf32, #tpu.memory_space<vmem>>, vector<8x128xf32>
    %21 = arith.addf %20, %16 : vector<8x128xf32>
    %c0_12 = arith.constant 0 : index
    %c0_13 = arith.constant 0 : index
    %22 = vector.load %arg7[%c0_12, %c0_13] : memref<8x128xf32, #tpu.memory_space<vmem>>, vector<8x128xf32>
    tpu.vector_store %arg7[%c0_12, %c0_13], %21 {strides = array<i32>} : memref<8x128xf32, #tpu.memory_space<vmem>>, vector<8x128xf32>,
    %c0_i32_14 = arith.constant 0 : i32
    %23 = arith.cmpi eq, %arg1, %c0_i32_14 : i32
    %24 = arith.extui %23 : i1 to i32
    %c0_i32_15 = arith.constant 0 : i32
    %25 = arith.cmpi ne, %24, %c0_i32_15 : i32
    scf.if %25 {
      %c0_16 = arith.constant 0 : index
      %c0_17 = arith.constant 0 : index
      %26 = vector.load %arg6[%c0_16, %c0_17] : memref<8x128xf32, #tpu.memory_space<vmem>>, vector<8x128xf32>
      %27 = vector.shape_cast %26 : vector<8x128xf32> to vector<1x8x128xf32>
      %cst_18 = arith.constant dense<0.000000e+00> : vector<1xf32>
      %28 = vector.multi_reduction <add>, %27, %cst_18 [1, 2] : vector<1x8x128xf32> to vector<1xf32>
      %29 = vector.shape_cast %28 : vector<1xf32> to vector<1x1x1xf32>
      %30 = vector.extract %29[0, 0, 0] : f32 from vector<1x1x1xf32>
      %c0_19 = arith.constant 0 : index
      %c0_20 = arith.constant 0 : index
      %31 = memref.load %arg4[%c0_19, %c0_20] : memref<1x1xf32, #tpu.memory_space<smem>>
      memref.store %30, %arg4[%c0_19, %c0_20] : memref<1x1xf32, #tpu.memory_space<smem>>
      %c0_21 = arith.constant 0 : index
      %c0_22 = arith.constant 0 : index
      %32 = vector.load %arg7[%c0_21, %c0_22] : memref<8x128xf32, #tpu.memory_space<vmem>>, vector<8x128xf32>
      %33 = vector.shape_cast %32 : vector<8x128xf32> to vector<1x8x128xf32>
      %cst_23 = arith.constant dense<0.000000e+00> : vector<1xf32>
      %34 = vector.multi_reduction <add>, %33, %cst_23 [1, 2] : vector<1x8x128xf32> to vector<1xf32>
      %35 = vector.shape_cast %34 : vector<1xf32> to vector<1x1x1xf32>
      %36 = vector.extract %35[0, 0, 0] : f32 from vector<1x1x1xf32>
      %c0_24 = arith.constant 0 : index
      %c0_25 = arith.constant 0 : index
      %37 = memref.load %arg5[%c0_24, %c0_25] : memref<1x1xf32, #tpu.memory_space<smem>>
      memref.store %36, %arg5[%c0_24, %c0_25] : memref<1x1xf32, #tpu.memory_space<smem>>
    } else {
    }
    return
  }
  func.func @transform_0(%arg0: i32, %arg1: i32) -> (i32, i32) {
    %c1_i32 = arith.constant 1 : i32
    %0 = arith.muli %arg0, %c1_i32 : i32
    %1 = arith.addi %0, %arg1 : i32
    %c0_i32 = arith.constant 0 : i32
    %2 = arith.minsi %1, %c0_i32 : i32
    %c0_i32_0 = arith.constant 0 : i32
    %c0_i32_1 = arith.constant 0 : i32
    return %2, %c0_i32_0 : i32, i32
  }
  func.func @transform_1(%arg0: i32, %arg1: i32) -> (i32, i32) {
    %c0_i32 = arith.constant 0 : i32
    %c0_i32_0 = arith.constant 0 : i32
    %c0_i32_1 = arith.constant 0 : i32
    return %c0_i32, %c0_i32_0 : i32, i32
  }
  func.func @transform_2(%arg0: i32, %arg1: i32) -> (i32, i32) {
    %c0_i32 = arith.constant 0 : i32
    %c0_i32_0 = arith.constant 0 : i32
    return %arg0, %c0_i32 : i32, i32
  }
  func.func @transform_3(%arg0: i32, %arg1: i32) -> (i32, i32) {
    %c0_i32 = arith.constant 0 : i32
    %c0_i32_0 = arith.constant 0 : i32
    return %arg0, %c0_i32 : i32, i32
  }
}

</mosaic_0001>

<llo_original>
// kernel: tpu_custom_call.1
$region0: #{tpu_custom_call.1}
  #allocation0 [shape = 'u32[]', space=smem, size = 0x4, offset = 0x4, fixed_abs, tag = 'smem constant byte address 0x4 - core index']
  #allocation1 [shape = 'u32[144,128]{1,0:T(1,128)}', space=vmem, size = 0x12000, scoped, tag = 'internal scratch']
  #allocation2 [shape = 'f32[8,128]{1,0:T(8,128)}', space=vmem, size = 0x1000, scoped, tag = 'scratch operand']
  #allocation3 [shape = 'f32[8,128]{1,0:T(8,128)}', space=vmem, size = 0x1000, scoped, tag = 'scratch operand']
  #allocation4 [shape = 'f32[1,1]{1,0:T(1,128)S(6)}', space=smem, size = 0x200, scoped, tag = 'scoped memory for tpu_custom_call.1']
  %s0 = inlined_call_operand.hbm [shape: f32[16,128], index: 0, kind: input, shape index: {}]
  %s1 = inlined_call_operand.<no memory space> [shape: f32[1,1], index: 1, kind: input, shape index: {}]
  %s2 = inlined_call_operand.hbm [shape: f32[1,1], index: 2, kind: output, shape index: {0}]
  %s3 = inlined_call_operand.hbm [shape: f32[1,1], index: 3, kind: output, shape index: {1}]
  %4 = xla_tuple %s2, %s3
  %s5 = sld [smem:[#allocation0]]
  $region38: #{tpu_custom_call.1} parent=0
    _
  %s7 = ssub.s32 1, %s5
  %s8 = scalar_select 0, %s7, %s5
  %9 = sst [smem:[#allocation4]] %s1
  $region1: #{tpu_custom_call.1} parent=0
    #allocation5 [shape = 'u8[8192]{0}', space=vmem, size = 0x2000, scoped, tag = 'input window, operand 0, single buffered']
    #allocation6 [shape = 's32[1]{0}', space=sflag, size = 0x4, scoped, tag = 'scoped memory for tpu_custom_call.1']
    #allocation7 [shape = 's32[1]{0}', space=sflag, size = 0x4, scoped, tag = 'scoped memory for tpu_custom_call.1']
    #allocation8 [shape = 'u8[512]{0}', space=smem, size = 0x200, scoped, tag = 'output window, operand 0, single buffered']
    #allocation9 [shape = 'u8[512]{0}', space=smem, size = 0x200, scoped, tag = 'output window, operand 1, single buffered']
    #allocation10 [shape = 's32[1]{0}', space=sflag, size = 0x4, scoped, tag = 'scoped memory for tpu_custom_call.1']
    %10 = vsyncpa [#allocation6], 0
    %11 = vsyncpa [#allocation7], 0
    %12 = vsyncpa [#allocation10], 0
    // Predicated region
    $region2: #{tpu_custom_call.1} parent=1 // pred_check
      _
    $region3: #{tpu_custom_call.1} parent=1 // pred_check_branch
      %14 = sbr.rel (0) target = $region5
    $region4: #{tpu_custom_call.1} parent=1 // pred_region
      %s15 = sadd.s32 0, 0
      %p16 = scmp.lt.s32.totalorder %s15, 0
      %s17 = scalar_select %p16, %s15, 0
      %s18 = smul.u32 2, %s17
      %s20 = ssub.s32 256, 256
      %21 = vsyncadd [#allocation6], %s20
      %s22 = smul.addr %s18, 128
      %s23 = scalar_lea.hbm %s0, %s22
      %s24 = sshll.u32 [#allocation5], 4
      %s25 = int_to_ptr.vmem [resolvable:$true] %s24
      %30 = dma.hbm_to_vmem [thread:$0]  %s23, 256, %s25, [#allocation6], 128, 128, 8
    $region5: #{tpu_custom_call.1} parent=1 // pred_fallthru
      _
    // Predicated region
    $region6: #{tpu_custom_call.1} parent=1 // pred_check
      _
    $region7: #{tpu_custom_call.1} parent=1 // pred_check_branch
      %32 = sbr.rel (0) target = $region9
    $region8: #{tpu_custom_call.1} parent=1 // pred_region
      _
    $region9: #{tpu_custom_call.1} parent=1 // pred_fallthru
      _
    // Predicated region
    $region10: #{tpu_custom_call.1} parent=1 // pred_check
      _
    $region11: #{tpu_custom_call.1} parent=1 // pred_check_branch
      %34 = sbr.rel (0) target = $region13
    $region12: #{tpu_custom_call.1} parent=1 // pred_region
      %35 = dma.done [#allocation6], 256
    $region13: #{tpu_custom_call.1} parent=1 // pred_fallthru
      _
    %s36 = sadd.s32 0, 0
    %p37 = scmp.lt.s32.totalorder %s36, 0
    %s38 = scalar_select %p37, %s36, 0
    %s39 = smul.u32 2, %s38
    %p40 = scmp.eq.s32.totalorder 0, 0
    // Predicated region
    $region14: #{tpu_custom_call.1} parent=1 // pred_check
      %p41 = pneg %p40
    $region15: #{tpu_custom_call.1} parent=1 // pred_check_branch
      %43 = sbr.rel (%p41) target = $region17
    $region16: #{tpu_custom_call.1} parent=1 // pred_region
      %44 = vst [vmem:[#allocation2] sm:$0xff] 0.0
      %45 = vst [vmem:[#allocation3] sm:$0xff] 0.0
    $region17: #{tpu_custom_call.1} parent=1 // pred_fallthru
      _
    %s46 = sld [smem:[#allocation4]]
    %v47 = vld [vmem:[#allocation5] sm:$0xff]
    %v48 = vld [vmem:[#allocation5 + $0x8] sm:$0xff]
    %v49 = vstv %s46
    %v50 = vsub.f32 %v47, %v49
    %v51 = vsub.f32 %v48, %v49
    %v52 = vadd.f32 %v50, %v51
    %v53 = vadd.f32 %v52, 0.0
    %v54 = vmul.f32 %v50, %v50
    %v55 = vmul.f32 %v51, %v51
    %v56 = vadd.f32 %v54, %v55
    %v57 = vadd.f32 %v56, 0.0
    %v58 = vld [vmem:[#allocation2] sm:$0xff]
    %v59 = vadd.f32 %v58, %v53
    %60 = vst [vmem:[#allocation2] sm:$0xff] %v59
    %v61 = vld [vmem:[#allocation3] sm:$0xff]
    %v62 = vadd.f32 %v61, %v57
    %63 = vst [vmem:[#allocation3] sm:$0xff] %v62
    // Predicated region
    $region18: #{tpu_custom_call.1} parent=1 // pred_check
      %p64 = pneg %p40
    $region19: #{tpu_custom_call.1} parent=1 // pred_check_branch
      %66 = sbr.rel (%p64) target = $region21
    $region20: #{tpu_custom_call.1} parent=1 // pred_region
      %v67 = vld [vmem:[#allocation2] sm:$0xff]
      %68 = vadd.xlane.f32.xlu0 %v67
      %v69 = vpop.xlane.xlu0 %68
      %v70 = vrot.slane %v69, 4
      %v71 = vadd.f32 %v69, %v70
      %v72 = vrot.slane %v71, 2
      %v73 = vadd.f32 %v71, %v72
      %v74 = vrot.slane %v73, 1
      %v75 = vadd.f32 %v73, %v74
      %s76 = vtos %v75
      %s77 = scalar_lea.smem [#allocation8], 0
      %78 = sst [smem:[%s77]] %s76
      %v79 = vld [vmem:[#allocation3] sm:$0xff]
      %80 = vadd.xlane.f32.xlu0 %v79
      %v81 = vpop.xlane.xlu0 %80
      %v82 = vrot.slane %v81, 4
      %v83 = vadd.f32 %v81, %v82
      %v84 = vrot.slane %v83, 2
      %v85 = vadd.f32 %v83, %v84
      %v86 = vrot.slane %v85, 1
      %v87 = vadd.f32 %v85, %v86
      %s88 = vtos %v87
      %s89 = scalar_lea.smem [#allocation9], 0
      %90 = sst [smem:[%s89]] %s88
    $region21: #{tpu_custom_call.1} parent=1 // pred_fallthru
      _
    // Predicated region
    $region22: #{tpu_custom_call.1} parent=1 // pred_check
      _
    $region23: #{tpu_custom_call.1} parent=1 // pred_check_branch
      %92 = sbr.rel (0) target = $region25
    $region24: #{tpu_custom_call.1} parent=1 // pred_region
      %s94 = ssub.s32 16, 16
      %95 = vsyncadd [#allocation7], %s94
      %98 = dma.smem_to_hbm [#allocation8], 16, %s2, [#allocation7]
    $region25: #{tpu_custom_call.1} parent=1 // pred_fallthru
      _
    // Predicated region
    $region26: #{tpu_custom_call.1} parent=1 // pred_check
      _
    $region27: #{tpu_custom_call.1} parent=1 // pred_check_branch
      %100 = sbr.rel (0) target = $region29
    $region28: #{tpu_custom_call.1} parent=1 // pred_region
      %s102 = ssub.s32 16, 16
      %103 = vsyncadd [#allocation10], %s102
      %106 = dma.smem_to_hbm [#allocation9], 16, %s3, [#allocation10]
    $region29: #{tpu_custom_call.1} parent=1 // pred_fallthru
      _
    // Predicated region
    $region30: #{tpu_custom_call.1} parent=1 // pred_check
      _
    $region31: #{tpu_custom_call.1} parent=1 // pred_check_branch
      %108 = sbr.rel (0) target = $region33
    $region32: #{tpu_custom_call.1} parent=1 // pred_region
      %109 = dma.done [#allocation7], 16
    $region33: #{tpu_custom_call.1} parent=1 // pred_fallthru
      _
    // Predicated region
    $region34: #{tpu_custom_call.1} parent=1 // pred_check
      _
    $region35: #{tpu_custom_call.1} parent=1 // pred_check_branch
      %111 = sbr.rel (0) target = $region37
    $region36: #{tpu_custom_call.1} parent=1 // pred_region
      %112 = dma.done [#allocation10], 16
    $region37: #{tpu_custom_call.1} parent=1 // pred_fallthru
      _
    %113 = sfence
    %114 = vsyncpa [#allocation6], 1
    %115 = vsyncpa [#allocation7], 1
    %116 = vsyncpa [#allocation10], 1

</llo_original>
